<compile_context>
chip_gen: v7x
topology: tpu7x:2x2x1
jax: 0.10.0
libtpu: 0.0.40
codegen_flags: <defaults>
</compile_context>

<pallas_src>
import functools

import jax
import jax.numpy as jnp
from jax.experimental import pallas as pl
from jax.experimental.pallas import tpu as pltpu


def ca_kernel(x_ref, w1_ref, b1_ref, w2_ref, b2_ref, out_ref,
              sum_ref, max_ref, *, thw, hw_total, inv_hw, needs_mask):
    """Grid: (batch_tiles, hw_tiles); HW is the inner ('arbitrary') axis.

    x_ref:  (tb, C, thw)  input tile (HW on the lane axis)
    w1_ref: (C, Cr)  b1_ref: (1, Cr)  w2_ref: (Cr, C)  b2_ref: (1, C)
    out_ref:(tb, 1, C)    pooled channel-attention map for this batch tile
    sum_ref/max_ref: (tb, C) f32 VMEM accumulators (persist across hw tiles)
    """
    hw_idx = pl.program_id(1)

    @pl.when(hw_idx == 0)
    def _init():
        sum_ref[...] = jnp.zeros_like(sum_ref)
        max_ref[...] = jnp.full_like(max_ref, -jnp.inf)

    x = x_ref[...].astype(jnp.float32)                    # (tb, C, thw)
    if needs_mask:
        # Mask out the padded lanes of the (possibly) ragged last HW tile.
        lane = jax.lax.broadcasted_iota(jnp.int32, x.shape, 2)
        valid = (hw_idx * thw + lane) < hw_total
        x_sum = jnp.where(valid, x, 0.0)
        x_max = jnp.where(valid, x, -jnp.inf)
    else:
        x_sum = x
        x_max = x
    sum_ref[...] += jnp.sum(x_sum, axis=-1)               # running sum (mean)
    max_ref[...] = jnp.maximum(max_ref[...], jnp.max(x_max, axis=-1))

    @pl.when(hw_idx == pl.num_programs(1) - 1)
    def _finalize():
        gap = sum_ref[...] * inv_hw                       # (tb, C) AdaptiveAvgPool
        gmp = max_ref[...]                                # (tb, C) AdaptiveMaxPool
        w1 = w1_ref[...]
        b1 = b1_ref[...]
        # Equivalent to torch: cat((gap, gmp), 0) -> Linear/ReLU/Linear ->
        # out[:B] + out[B:]; the second Linear is linear so the halves merge.
        h_gap = jnp.maximum(
            jnp.dot(gap, w1, preferred_element_type=jnp.float32) + b1, 0.0)
        h_gmp = jnp.maximum(
            jnp.dot(gmp, w1, preferred_element_type=jnp.float32) + b1, 0.0)
        att = (jnp.dot(h_gap + h_gmp, w2_ref[...],
                       preferred_element_type=jnp.float32)
               + 2.0 * b2_ref[...])                       # (tb, C)
        out_ref[...] = att[:, None, :].astype(out_ref.dtype)


def _pick_tiles(B, C, HW, itemsize, input_budget_bytes=16 << 20):
    """Pick (tb, thw).

    tb : largest divisor of B that is <= min(8, B // 2), so there are at
         least two batch tiles whenever B >= 2 (lets v7x's two TensorCores
         split the 'parallel' axis) and the tile never scales with B.
    thw: widest lane-aligned chunk (<= 2048) whose double-buffered input
         tile fits the budget; clamped to HW (full extent) for small inputs.
         The ragged last tile (HW % thw != 0) is masked inside the kernel.
    """
    tb = 1
    if B > 1:
        cap = min(8, B // 2)
        for d in range(cap, 0, -1):
            if B % d == 0:
                tb = d
                break

    thw = 128
    for cand in (2048, 1024, 512, 256, 128):
        if 2 * tb * C * cand * itemsize <= input_budget_bytes:
            thw = cand
            break
    if thw >= HW:
        thw = HW                      # single full-extent block (always legal)
    return tb, thw


def ca_layer(x, w1, b1, w2, b2):
    """x: (B, C, H, W) NCHW. Returns the channel attention map (B, C, H, W)."""
    B, C, H, W = x.shape
    HW = H * W
    x3 = x.reshape(B, C, HW)
    tb, thw = _pick_tiles(B, C, HW, x.dtype.itemsize)
    n_hw = pl.cdiv(HW, thw)
    needs_mask = (HW % thw) != 0

    kernel = functools.partial(
        ca_kernel, thw=thw, hw_total=HW, inv_hw=1.0 / HW, needs_mask=needs_mask)

    # Default double-buffering is enough: at thw >= 512 the pipeline is
    # DMA-bound and per-step overhead is amortized (review item: only consider
    # pl.Buffered(3) if a shape ever forces thw <= 256).
    att3 = pl.pallas_call(
        kernel,
        out_shape=jax.ShapeDtypeStruct((B, 1, C), jnp.float32),
        grid_spec=pltpu.PrefetchScalarGridSpec(
            num_scalar_prefetch=0,
            grid=(B // tb, n_hw),
            in_specs=[
                pl.BlockSpec((tb, C, thw), lambda b, k: (b, 0, k)),
                pl.BlockSpec(w1.shape, lambda b, k: (0, 0)),   # constant blocks:
                pl.BlockSpec(b1.shape, lambda b, k: (0, 0)),   # DMA'd once, kept
                pl.BlockSpec(w2.shape, lambda b, k: (0, 0)),   # resident in VMEM
                pl.BlockSpec(b2.shape, lambda b, k: (0, 0)),
            ],
            out_specs=pl.BlockSpec((tb, 1, C), lambda b, k: (b, 0, 0)),
            scratch_shapes=[
                pltpu.VMEM((tb, C), jnp.float32),   # running sum
                pltpu.VMEM((tb, C), jnp.float32),   # running max
            ],
        ),
        compiler_params=pltpu.CompilerParams(
            dimension_semantics=("parallel", "arbitrary"),
            vmem_limit_bytes=48 << 20,   # < v7x's 64 MiB physical VMEM
        ),
    )(x3, w1, b1, w2, b2)

    att = att3[:, 0, :]
    # Broadcast outside the kernel (view-style expand in XLA; avoids writing
    # B*C*H*W bytes from the kernel). The original module has no sigmoid or
    # multiply-by-x: it returns the expanded attention map itself.
    return jnp.broadcast_to(att.astype(x.dtype)[:, :, None, None], (B, C, H, W))


def init_params(key, num_channels, reduction_ratio=16):
    """Deterministic PyTorch-Linear-style init (uniform +-1/sqrt(fan_in))."""
    hidden = num_channels // reduction_ratio
    k1, k2, k3, k4 = jax.random.split(key, 4)
    bound1 = 1.0 / jnp.sqrt(num_channels)
    bound2 = 1.0 / jnp.sqrt(hidden)
    # Stored transposed (in, out) so the kernel does row @ W.
    w1 = jax.random.uniform(k1, (num_channels, hidden), jnp.float32, -bound1, bound1)
    b1 = jax.random.uniform(k2, (1, hidden), jnp.float32, -bound1, bound1)
    w2 = jax.random.uniform(k3, (hidden, num_channels), jnp.float32, -bound2, bound2)
    b2 = jax.random.uniform(k4, (1, num_channels), jnp.float32, -bound2, bound2)
    return w1, b1, w2, b2


def ca_layer_ref(x, w1, b1, w2, b2):
    """Pure-JAX reference mirroring the PyTorch forward exactly."""
    B, C, H, W = x.shape
    gap = jnp.mean(x, axis=(2, 3))                   # (B, C)
    gmp = jnp.max(x, axis=(2, 3))                    # (B, C)
    feats = jnp.concatenate([gap, gmp], axis=0)      # (2B, C)
    h = jnp.maximum(feats @ w1 + b1, 0.0)
    out = h @ w2 + b2                                # (2B, C)
    att = out[:B] + out[B:]                          # (B, C)
    return jnp.broadcast_to(att[:, :, None, None], (B, C, H, W))


if __name__ == "__main__":
    B, C, H, W = 2, 32, 16, 16                       # C divisible by reduction=16
    key = jax.random.PRNGKey(0)
    kx, kp = jax.random.split(key)
    x = jax.random.normal(kx, (B, C, H, W), dtype=jnp.float32)
    w1, b1, w2, b2 = init_params(kp, C, reduction_ratio=16)

    out = jax.block_until_ready(ca_layer(x, w1, b1, w2, b2))

    ref = ca_layer_ref(x, w1, b1, w2, b2)
    assert out.shape == (B, C, H, W)
    assert jnp.allclose(out, ref, atol=1e-5, rtol=1e-5), "mismatch vs reference"

    print("KERNEL_OK")
</pallas_src>

<mosaic_0001>
module attributes {stable_mosaic.version = 11 : i64} {
  func.func @ca_kernel(%arg0: i32, %arg1: i32, %arg2: memref<1x32x256xf32, #tpu.memory_space<vmem>>, %arg3: memref<32x2xf32, #tpu.memory_space<vmem>>, %arg4: memref<1x2xf32, #tpu.memory_space<vmem>>, %arg5: memref<2x32xf32, #tpu.memory_space<vmem>>, %arg6: memref<1x32xf32, #tpu.memory_space<vmem>>, %arg7: memref<1x1x32xf32, #tpu.memory_space<vmem>>, %arg8: memref<1x32xf32, #tpu.memory_space<vmem>>, %arg9: memref<1x32xf32, #tpu.memory_space<vmem>>) attributes {dimension_semantics = [#tpu.dimension_semantics<parallel>, #tpu.dimension_semantics<arbitrary>], iteration_bounds = array<i64: 2, 1>, scalar_prefetch = 0 : i64, scratch_operands = 2 : i64, tpu.core_type = #tpu.core_type<tc>, window_params = [{transform_indices = @transform_0, window_bounds = array<i64: 1, 32, 256>}, {pipeline_mode = #tpu.pipeline_mode<synchronous>, transform_indices = @transform_1, window_bounds = array<i64: 32, 2>}, {pipeline_mode = #tpu.pipeline_mode<synchronous>, transform_indices = @transform_2, window_bounds = array<i64: 1, 2>}, {pipeline_mode = #tpu.pipeline_mode<synchronous>, transform_indices = @transform_3, window_bounds = array<i64: 2, 32>}, {pipeline_mode = #tpu.pipeline_mode<synchronous>, transform_indices = @transform_4, window_bounds = array<i64: 1, 32>}, {transform_indices = @transform_5, window_bounds = array<i64: 1, 1, 32>}]} {
    %c0_i32 = arith.constant 0 : i32
    %0 = arith.cmpi eq, %arg1, %c0_i32 : i32
    %1 = arith.extui %0 : i1 to i32
    %c0_i32_0 = arith.constant 0 : i32
    %2 = arith.cmpi ne, %1, %c0_i32_0 : i32
    scf.if %2 {
      %cst_14 = arith.constant 0.000000e+00 : f32
      %15 = vector.broadcast %cst_14 : f32 to vector<1x32xf32>
      %c0_15 = arith.constant 0 : index
      %c0_16 = arith.constant 0 : index
      %16 = vector.load %arg8[%c0_15, %c0_16] : memref<1x32xf32, #tpu.memory_space<vmem>>, vector<1x32xf32>
      tpu.vector_store %arg8[%c0_15, %c0_16], %15 {strides = array<i32>} : memref<1x32xf32, #tpu.memory_space<vmem>>, vector<1x32xf32>,
      %cst_17 = arith.constant 0xFF800000 : f32
      %17 = vector.broadcast %cst_17 : f32 to vector<1x32xf32>
      %c0_18 = arith.constant 0 : index
      %c0_19 = arith.constant 0 : index
      %18 = vector.load %arg9[%c0_18, %c0_19] : memref<1x32xf32, #tpu.memory_space<vmem>>, vector<1x32xf32>
      tpu.vector_store %arg9[%c0_18, %c0_19], %17 {strides = array<i32>} : memref<1x32xf32, #tpu.memory_space<vmem>>, vector<1x32xf32>,
    } else {
    }
    %c0 = arith.constant 0 : index
    %c0_1 = arith.constant 0 : index
    %c0_2 = arith.constant 0 : index
    %3 = vector.load %arg2[%c0, %c0_1, %c0_2] : memref<1x32x256xf32, #tpu.memory_space<vmem>>, vector<1x32x256xf32>
    %c0_3 = arith.constant 0 : index
    %c0_4 = arith.constant 0 : index
    %4 = vector.load %arg8[%c0_3, %c0_4] : memref<1x32xf32, #tpu.memory_space<vmem>>, vector<1x32xf32>
    %cst = arith.constant dense<0.000000e+00> : vector<1x32xf32>
    %5 = vector.multi_reduction <add>, %3, %cst [2] : vector<1x32x256xf32> to vector<1x32xf32>
    %6 = arith.addf %4, %5 : vector<1x32xf32>
    %c0_5 = arith.constant 0 : index
    %c0_6 = arith.constant 0 : index
    %7 = vector.load %arg8[%c0_5, %c0_6] : memref<1x32xf32, #tpu.memory_space<vmem>>, vector<1x32xf32>
    tpu.vector_store %arg8[%c0_5, %c0_6], %6 {strides = array<i32>} : memref<1x32xf32, #tpu.memory_space<vmem>>, vector<1x32xf32>,
    %c0_7 = arith.constant 0 : index
    %c0_8 = arith.constant 0 : index
    %8 = vector.load %arg9[%c0_7, %c0_8] : memref<1x32xf32, #tpu.memory_space<vmem>>, vector<1x32xf32>
    %cst_9 = arith.constant dense<0xFF800000> : vector<1x32xf32>
    %9 = vector.multi_reduction <maximumf>, %3, %cst_9 [2] : vector<1x32x256xf32> to vector<1x32xf32>
    %10 = arith.maximumf %8, %9 : vector<1x32xf32>
    %c0_10 = arith.constant 0 : index
    %c0_11 = arith.constant 0 : index
    %11 = vector.load %arg9[%c0_10, %c0_11] : memref<1x32xf32, #tpu.memory_space<vmem>>, vector<1x32xf32>
    tpu.vector_store %arg9[%c0_10, %c0_11], %10 {strides = array<i32>} : memref<1x32xf32, #tpu.memory_space<vmem>>, vector<1x32xf32>,
    %c0_i32_12 = arith.constant 0 : i32
    %12 = arith.cmpi eq, %arg1, %c0_i32_12 : i32
    %13 = arith.extui %12 : i1 to i32
    %c0_i32_13 = arith.constant 0 : i32
    %14 = arith.cmpi ne, %13, %c0_i32_13 : i32
    scf.if %14 {
      %c0_14 = arith.constant 0 : index
      %c0_15 = arith.constant 0 : index
      %15 = vector.load %arg8[%c0_14, %c0_15] : memref<1x32xf32, #tpu.memory_space<vmem>>, vector<1x32xf32>
      %cst_16 = arith.constant 3.906250e-03 : f32
      %16 = vector.broadcast %cst_16 : f32 to vector<1x32xf32>
      %17 = arith.mulf %15, %16 : vector<1x32xf32>
      %c0_17 = arith.constant 0 : index
      %c0_18 = arith.constant 0 : index
      %18 = vector.load %arg9[%c0_17, %c0_18] : memref<1x32xf32, #tpu.memory_space<vmem>>, vector<1x32xf32>
      %c0_19 = arith.constant 0 : index
      %c0_20 = arith.constant 0 : index
      %19 = vector.load %arg3[%c0_19, %c0_20] : memref<32x2xf32, #tpu.memory_space<vmem>>, vector<32x2xf32>
      %c0_21 = arith.constant 0 : index
      %c0_22 = arith.constant 0 : index
      %20 = vector.load %arg4[%c0_21, %c0_22] : memref<1x2xf32, #tpu.memory_space<vmem>>, vector<1x2xf32>
      %cst_23 = arith.constant dense<0.000000e+00> : vector<1x2xf32>
      %21 = tpu.matmul %17, %19, %cst_23 {dimension_numbers = #tpu.dot_dimension_numbers<[1], [0], [0], [1], [0, 0, 1, 1], [], []>} : vector<1x32xf32>, vector<32x2xf32>, vector<1x2xf32> -> vector<1x2xf32>
      %22 = arith.addf %21, %20 : vector<1x2xf32>
      %cst_24 = arith.constant 0.000000e+00 : f32
      %23 = vector.broadcast %cst_24 : f32 to vector<1x2xf32>
      %24 = arith.maximumf %22, %23 : vector<1x2xf32>
      %cst_25 = arith.constant dense<0.000000e+00> : vector<1x2xf32>
      %25 = tpu.matmul %18, %19, %cst_25 {dimension_numbers = #tpu.dot_dimension_numbers<[1], [0], [0], [1], [0, 0, 1, 1], [], []>} : vector<1x32xf32>, vector<32x2xf32>, vector<1x2xf32> -> vector<1x2xf32>
      %26 = arith.addf %25, %20 : vector<1x2xf32>
      %cst_26 = arith.constant 0.000000e+00 : f32
      %27 = vector.broadcast %cst_26 : f32 to vector<1x2xf32>
      %28 = arith.maximumf %26, %27 : vector<1x2xf32>
      %29 = arith.addf %24, %28 : vector<1x2xf32>
      %c0_27 = arith.constant 0 : index
      %c0_28 = arith.constant 0 : index
      %30 = vector.load %arg5[%c0_27, %c0_28] : memref<2x32xf32, #tpu.memory_space<vmem>>, vector<2x32xf32>
      %cst_29 = arith.constant dense<0.000000e+00> : vector<1x32xf32>
      %31 = tpu.matmul %29, %30, %cst_29 {dimension_numbers = #tpu.dot_dimension_numbers<[1], [0], [0], [1], [0, 0, 1, 1], [], []>} : vector<1x2xf32>, vector<2x32xf32>, vector<1x32xf32> -> vector<1x32xf32>
      %c0_30 = arith.constant 0 : index
      %c0_31 = arith.constant 0 : index
      %32 = vector.load %arg6[%c0_30, %c0_31] : memref<1x32xf32, #tpu.memory_space<vmem>>, vector<1x32xf32>
      %cst_32 = arith.constant 2.000000e+00 : f32
      %33 = vector.broadcast %cst_32 : f32 to vector<1x32xf32>
      %34 = arith.mulf %33, %32 : vector<1x32xf32>
      %35 = arith.addf %31, %34 : vector<1x32xf32>
      %36 = vector.shape_cast %35 : vector<1x32xf32> to vector<1x1x32xf32>
      %c0_33 = arith.constant 0 : index
      %c0_34 = arith.constant 0 : index
      %c0_35 = arith.constant 0 : index
      %37 = vector.load %arg7[%c0_33, %c0_34, %c0_35] : memref<1x1x32xf32, #tpu.memory_space<vmem>>, vector<1x1x32xf32>
      tpu.vector_store %arg7[%c0_33, %c0_34, %c0_35], %36 {strides = array<i32>} : memref<1x1x32xf32, #tpu.memory_space<vmem>>, vector<1x1x32xf32>,
    } else {
    }
    return
  }
  func.func @transform_0(%arg0: i32, %arg1: i32) -> (i32, i32, i32) {
    %c0_i32 = arith.constant 0 : i32
    %c0_i32_0 = arith.constant 0 : i32
    return %arg0, %c0_i32, %arg1 : i32, i32, i32
  }
  func.func @transform_1(%arg0: i32, %arg1: i32) -> (i32, i32) {
    %c0_i32 = arith.constant 0 : i32
    %c0_i32_0 = arith.constant 0 : i32
    %c0_i32_1 = arith.constant 0 : i32
    return %c0_i32, %c0_i32_0 : i32, i32
  }
  func.func @transform_2(%arg0: i32, %arg1: i32) -> (i32, i32) {
    %c0_i32 = arith.constant 0 : i32
    %c0_i32_0 = arith.constant 0 : i32
    %c0_i32_1 = arith.constant 0 : i32
    return %c0_i32, %c0_i32_0 : i32, i32
  }
  func.func @transform_3(%arg0: i32, %arg1: i32) -> (i32, i32) {
    %c0_i32 = arith.constant 0 : i32
    %c0_i32_0 = arith.constant 0 : i32
    %c0_i32_1 = arith.constant 0 : i32
    return %c0_i32, %c0_i32_0 : i32, i32
  }
  func.func @transform_4(%arg0: i32, %arg1: i32) -> (i32, i32) {
    %c0_i32 = arith.constant 0 : i32
    %c0_i32_0 = arith.constant 0 : i32
    %c0_i32_1 = arith.constant 0 : i32
    return %c0_i32, %c0_i32_0 : i32, i32
  }
  func.func @transform_5(%arg0: i32, %arg1: i32) -> (i32, i32, i32) {
    %c0_i32 = arith.constant 0 : i32
    %c0_i32_0 = arith.constant 0 : i32
    %c0_i32_1 = arith.constant 0 : i32
    return %arg0, %c0_i32, %c0_i32_0 : i32, i32, i32
  }
}

</mosaic_0001>

<llo_original>
// kernel: tpu_custom_call.1
$region0: #{tpu_custom_call.1}
  #allocation0 [shape = 'u32[]', space=smem, size = 0x4, offset = 0x4, fixed_abs, tag = 'smem constant byte address 0x4 - core index']
  #allocation1 [shape = 'u32[144,128]{1,0:T(1,128)}', space=vmem, size = 0x12000, scoped, tag = 'internal scratch']
  #allocation2 [shape = 'f32[1,32]{1,0:T(1,128)}', space=vmem, size = 0x200, scoped, tag = 'scratch operand']
  #allocation3 [shape = 'f32[1,32]{1,0:T(1,128)}', space=vmem, size = 0x200, scoped, tag = 'scratch operand']
  %s0 = inlined_call_operand.hbm [shape: f32[2,32,256], index: 0, kind: input, shape index: {}]
  %s1 = inlined_call_operand.vmem [shape: f32[32,2], index: 1, kind: input, shape index: {}]
  %s2 = inlined_call_operand.vmem [shape: f32[1,2], index: 2, kind: input, shape index: {}]
  %s3 = inlined_call_operand.vmem [shape: f32[2,32], index: 3, kind: input, shape index: {}]
  %s4 = inlined_call_operand.vmem [shape: f32[1,32], index: 4, kind: input, shape index: {}]
  %s5 = inlined_call_operand.hbm [shape: f32[2,1,32], index: 5, kind: output, shape index: {}]
  %s6 = sld [smem:[#allocation0]]
  $region65: #{tpu_custom_call.1} parent=0
    _
  %s8 = ssub.s32 1, %s6
  %s9 = scalar_select 0, %s8, %s6
  $region1: #{tpu_custom_call.1} parent=0
    #allocation4 [shape = 'u8[65536]{0}', space=vmem, size = 0x10000, scoped, tag = 'input window, operand 0']
    #allocation5 [shape = 's32[2]{0}', space=sflag, size = 0x8, scoped, tag = 'scoped memory for tpu_custom_call.1']
    #allocation6 [shape = 's32[2]{0}', space=sflag, size = 0x8, scoped, tag = 'scoped memory for tpu_custom_call.1']
    #allocation7 [shape = 'u8[1024]{0}', space=vmem, size = 0x400, scoped, tag = 'output window, operand 0']
    %10 = vsyncpa [#allocation5], 0
    %s11 = scalar_lea.sflag [#allocation5], 1
    %12 = vsyncpa %s11, 0
    %13 = vsyncpa [#allocation6], 0
    %s14 = scalar_lea.sflag [#allocation6], 1
    %15 = vsyncpa %s14, 0
    loop: start=0, step=1, limit=4
    $region2: #{tpu_custom_call.1} parent=1 // loop_pre_header
      _
    $region3: #{tpu_custom_call.1} parent=1 // loop_header
      %s17 = sphi 0, %s21
      %p18 = scmp.ge.s32.totalorder %s17, 4
      %s24 = sphi 0, %s36
      %s25 = sphi 0, %s32
      %s26 = sphi 0, %s24
      %s27 = sphi 0, %s25
      %s28 = sphi 0, %s26
      %s29 = sphi 0, %s27
      %s41 = sphi 0, %s43
      %s44 = sphi 0, %s41
      %s45 = sphi 0, %s44
      %s61 = sphi 0, %s45
      %s65 = sphi 0, %s65
      %s67 = sphi 0, %s65
      %s68 = sphi 0, %s67
      %s82 = sphi 0, %s68
      %s86 = sphi 0, %s86
      %s88 = sphi 0, %s86
      %s89 = sphi 0, %s88
      %s103 = sphi 0, %s89
      %s107 = sphi 0, %s107
      %s109 = sphi 0, %s107
      %s110 = sphi 0, %s109
      %s124 = sphi 0, %s110
      %s128 = sphi 0, %s128
      %s130 = sphi 0, %s128
      %s131 = sphi 0, %s130
      %s145 = sphi 0, %s131
      %s151 = sphi 0, %s153
      %s154 = sphi 0, %s151
      %s155 = sphi 0, %s154
      %s171 = sphi 0, %s155
    $region4: #{tpu_custom_call.1} parent=1 // loop_header_branch
      %20 = sbr.rel (%p18) target = $region8
    $region5: #{tpu_custom_call.1} parent=1 // loop_body
      %s22 = ssub.s32 %s17, 1
      %s23 = ssub.s32 %s17, 2
      %s30 = sadd.s32 1, %s25
      %p31 = scmp.ge.s32.totalorder %s30, 1
      %s32 = scalar_select %p31, 0, %s30
      %s33 = sadd.s32 1, %s24
      %s34 = scalar_select %p31, %s33, %s24
      %p35 = scmp.ge.s32.totalorder %s34, 2
      %s36 = scalar_select %p35, 0, %s34
      %s37 = ssub.s32 %s24, %s36
      %s38 = ssub.s32 %s25, %s32
      %s39 = sor.u32 %s37, %s38
      %p40 = scmp.eq.s32.totalorder %s39, 0
      %s42 = sadd.s32 %s41, 1
      %s43 = scalar_select %p40, %s41, %s42
      %p46 = pneg %p40
      %p47 = scmp.eq.s32.totalorder %s17, 1
      %p48 = por %p46, %p47
      %p49 = scmp.ne.s32.totalorder %s41, %s44
      %p50 = scmp.eq.s32.totalorder %s17, 0
      %p51 = por %p49, %p50
      %p52 = scmp.ne.s32.totalorder %s41, %s44
      %p53 = scmp.eq.s32.totalorder %s22, 1
      %p54 = por %p52, %p53
      %p55 = scmp.ne.s32.totalorder %s44, %s45
      %p56 = scmp.eq.s32.totalorder %s22, 0
      %p57 = por %p55, %p56
      %p58 = scmp.ne.s32.totalorder %s44, %s45
      %p59 = scmp.eq.s32.totalorder %s23, 1
      %p60 = por %p58, %p59
      %p62 = scmp.ne.s32.totalorder %s45, %s61
      %p63 = scmp.eq.s32.totalorder %s23, 0
      %p64 = por %p62, %p63
      %s66 = sadd.s32 %s65, 1
      %p69 = scmp.eq.s32.totalorder %s17, 1
      %p70 = scmp.ne.s32.totalorder %s65, %s67
      %p71 = scmp.eq.s32.totalorder %s17, 0
      %p72 = por %p70, %p71
      %p73 = scmp.ne.s32.totalorder %s65, %s67
      %p74 = scmp.eq.s32.totalorder %s22, 1
      %p75 = por %p73, %p74
      %p76 = scmp.ne.s32.totalorder %s67, %s68
      %p77 = scmp.eq.s32.totalorder %s22, 0
      %p78 = por %p76, %p77
      %p79 = scmp.ne.s32.totalorder %s67, %s68
      %p80 = scmp.eq.s32.totalorder %s23, 1
      %p81 = por %p79, %p80
      %p83 = scmp.ne.s32.totalorder %s68, %s82
      %p84 = scmp.eq.s32.totalorder %s23, 0
      %p85 = por %p83, %p84
      %s87 = sadd.s32 %s86, 1
      %p90 = scmp.eq.s32.totalorder %s17, 1
      %p91 = scmp.ne.s32.totalorder %s86, %s88
      %p92 = scmp.eq.s32.totalorder %s17, 0
      %p93 = por %p91, %p92
      %p94 = scmp.ne.s32.totalorder %s86, %s88
      %p95 = scmp.eq.s32.totalorder %s22, 1
      %p96 = por %p94, %p95
      %p97 = scmp.ne.s32.totalorder %s88, %s89
      %p98 = scmp.eq.s32.totalorder %s22, 0
      %p99 = por %p97, %p98
      %p100 = scmp.ne.s32.totalorder %s88, %s89
      %p101 = scmp.eq.s32.totalorder %s23, 1
      %p102 = por %p100, %p101
      %p104 = scmp.ne.s32.totalorder %s89, %s103
      %p105 = scmp.eq.s32.totalorder %s23, 0
      %p106 = por %p104, %p105
      %s108 = sadd.s32 %s107, 1
      %p111 = scmp.eq.s32.totalorder %s17, 1
      %p112 = scmp.ne.s32.totalorder %s107, %s109
      %p113 = scmp.eq.s32.totalorder %s17, 0
      %p114 = por %p112, %p113
      %p115 = scmp.ne.s32.totalorder %s107, %s109
      %p116 = scmp.eq.s32.totalorder %s22, 1
      %p117 = por %p115, %p116
      %p118 = scmp.ne.s32.totalorder %s109, %s110
      %p119 = scmp.eq.s32.totalorder %s22, 0
      %p120 = por %p118, %p119
      %p121 = scmp.ne.s32.totalorder %s109, %s110
      %p122 = scmp.eq.s32.totalorder %s23, 1
      %p123 = por %p121, %p122
      %p125 = scmp.ne.s32.totalorder %s110, %s124
      %p126 = scmp.eq.s32.totalorder %s23, 0
      %p127 = por %p125, %p126
      %s129 = sadd.s32 %s128, 1
      %p132 = scmp.eq.s32.totalorder %s17, 1
      %p133 = scmp.ne.s32.totalorder %s128, %s130
      %p134 = scmp.eq.s32.totalorder %s17, 0
      %p135 = por %p133, %p134
      %p136 = scmp.ne.s32.totalorder %s128, %s130
      %p137 = scmp.eq.s32.totalorder %s22, 1
      %p138 = por %p136, %p137
      %p139 = scmp.ne.s32.totalorder %s130, %s131
      %p140 = scmp.eq.s32.totalorder %s22, 0
      %p141 = por %p139, %p140
      %p142 = scmp.ne.s32.totalorder %s130, %s131
      %p143 = scmp.eq.s32.totalorder %s23, 1
      %p144 = por %p142, %p143
      %p146 = scmp.ne.s32.totalorder %s131, %s145
      %p147 = scmp.eq.s32.totalorder %s23, 0
      %p148 = por %p146, %p147
      %s149 = ssub.s32 %s24, %s36
      %p150 = scmp.eq.s32.totalorder %s149, 0
      %s152 = sadd.s32 %s151, 1
      %s153 = scalar_select %p150, %s151, %s152
      %p156 = pneg %p150
      %p157 = scmp.eq.s32.totalorder %s17, 1
      %p158 = por %p156, %p157
      %p159 = scmp.ne.s32.totalorder %s151, %s154
      %p160 = scmp.eq.s32.totalorder %s17, 0
      %p161 = por %p159, %p160
      %p162 = scmp.ne.s32.totalorder %s151, %s154
      %p163 = scmp.eq.s32.totalorder %s22, 1
      %p164 = por %p162, %p163
      %p165 = scmp.ne.s32.totalorder %s154, %s155
      %p166 = scmp.eq.s32.totalorder %s22, 0
      %p167 = por %p165, %p166
      %p168 = scmp.ne.s32.totalorder %s154, %s155
      %p169 = scmp.eq.s32.totalorder %s23, 1
      %p170 = por %p168, %p169
      %p172 = scmp.ne.s32.totalorder %s155, %s171
      %p173 = scmp.eq.s32.totalorder %s23, 0
      %p174 = por %p172, %p173
      %p175 = scmp.le.s32.totalorder 1, %s17
      %p176 = scmp.lt.s32.totalorder %s17, 3
      %p177 = pnand %p175, %p176
      %p178 = pneg %p177
      // Predicated region
      $region9: #{tpu_custom_call.1} parent=5 // pred_check
        _
      $region10: #{tpu_custom_call.1} parent=5 // pred_check_branch
        %180 = sbr.rel (%p177) target = $region12
      $region11: #{tpu_custom_call.1} parent=5 // pred_region
        %s181 = ssub.s32 %s17, 1
        // Predicated region
        $region13: #{tpu_custom_call.1} parent=11 // pred_check
          %p182 = pneg %p78
        $region14: #{tpu_custom_call.1} parent=11 // pred_check_branch
          %184 = sbr.rel (%p182) target = $region16
        $region15: #{tpu_custom_call.1} parent=11 // pred_region
          _
        $region16: #{tpu_custom_call.1} parent=11 // pred_fallthru
          _
        // Predicated region
        $region17: #{tpu_custom_call.1} parent=11 // pred_check
          %p185 = pneg %p99
        $region18: #{tpu_custom_call.1} parent=11 // pred_check_branch
          %187 = sbr.rel (%p185) target = $region20
        $region19: #{tpu_custom_call.1} parent=11 // pred_region
          _
        $region20: #{tpu_custom_call.1} parent=11 // pred_fallthru
          _
        // Predicated region
        $region21: #{tpu_custom_call.1} parent=11 // pred_check
          %p188 = pneg %p120
        $region22: #{tpu_custom_call.1} parent=11 // pred_check_branch
          %190 = sbr.rel (%p188) target = $region24
        $region23: #{tpu_custom_call.1} parent=11 // pred_region
          _
        $region24: #{tpu_custom_call.1} parent=11 // pred_fallthru
          _
        // Predicated region
        $region25: #{tpu_custom_call.1} parent=11 // pred_check
          %p191 = pneg %p141
        $region26: #{tpu_custom_call.1} parent=11 // pred_check_branch
          %193 = sbr.rel (%p191) target = $region28
        $region27: #{tpu_custom_call.1} parent=11 // pred_region
          _
        $region28: #{tpu_custom_call.1} parent=11 // pred_fallthru
          _
      $region12: #{tpu_custom_call.1} parent=5 // pred_fallthru
        _
      %p194 = scmp.lt.s32.totalorder %s17, 2
      // Predicated region
      $region29: #{tpu_custom_call.1} parent=5 // pred_check
        %p195 = pneg %p194
      $region30: #{tpu_custom_call.1} parent=5 // pred_check_branch
        %197 = sbr.rel (%p195) target = $region32
      $region31: #{tpu_custom_call.1} parent=5 // pred_region
        // Predicated region
        $region33: #{tpu_custom_call.1} parent=31 // pred_check
          %p198 = pneg %p51
        $region34: #{tpu_custom_call.1} parent=31 // pred_check_branch
          %200 = sbr.rel (%p198) target = $region36
        $region35: #{tpu_custom_call.1} parent=31 // pred_region
          %s201 = sand.u32 %s41, 1
          %s202 = scalar_lea.sflag [#allocation5], %s201
          %s203 = sand.u32 %s41, 1
          %s204 = smul.addr %s203, 64
          %s205 = scalar_lea.vmem [#allocation4], %s204
          %s206 = smul.u32 2, %s25
          %s208 = ssub.s32 1024, 1024
          %209 = vsyncadd %s202, %s208
          %s210 = smul.addr %s24, 8
          %s211 = sadd.s32 %s206, %s210
          %s212 = smul.addr %s211, 128
          %s213 = scalar_lea.hbm %s0, %s212
          %s214 = sshll.u32 %s205, 4
          %s215 = int_to_ptr.vmem [resolvable:$true] %s214
          %220 = dma.hbm_to_vmem [thread:$0]  %s213, 1024, %s215, %s202, 256, 256, 16
        $region36: #{tpu_custom_call.1} parent=31 // pred_fallthru
          _
      $region32: #{tpu_custom_call.1} parent=5 // pred_fallthru
        _
      %p221 = scmp.le.s32.totalorder 1, %s17
      %p222 = scmp.lt.s32.totalorder %s17, 3
      %p223 = pnand %p221, %p222
      %p224 = pneg %p223
      // Predicated region
      $region37: #{tpu_custom_call.1} parent=5 // pred_check
        _
      $region38: #{tpu_custom_call.1} parent=5 // pred_check_branch
        %226 = sbr.rel (%p223) target = $region40
      $region39: #{tpu_custom_call.1} parent=5 // pred_region
        %s227 = ssub.s32 %s17, 1
        %s228 = sand.u32 %s44, 1
        %s229 = scalar_lea.sflag [#allocation5], %s228
        %s230 = sand.u32 %s44, 1
        %s231 = smul.addr %s230, 64
        %s232 = scalar_lea.vmem [#allocation4], %s231
        // Predicated region
        $region41: #{tpu_custom_call.1} parent=39 // pred_check
          %p233 = pneg %p57
        $region42: #{tpu_custom_call.1} parent=39 // pred_check_branch
          %235 = sbr.rel (%p233) target = $region44
        $region43: #{tpu_custom_call.1} parent=39 // pred_region
          %236 = dma.done %s229, 1024
        $region44: #{tpu_custom_call.1} parent=39 // pred_fallthru
          _
        %s237 = sand.u32 %s44, 1
        %s238 = scalar_lea.sflag [#allocation5], %s237
        %s239 = sand.u32 %s44, 1
        %s240 = smul.addr %s239, 64
        %s241 = scalar_lea.vmem [#allocation4], %s240
        %p242 = pneg %p57
        %p243 = pneg %p54
        %p244 = pneg %p78
        %p245 = pneg %p75
        %p246 = pneg %p99
        %p247 = pneg %p96
        %p248 = pneg %p120
        %p249 = pneg %p117
        %p250 = pneg %p141
        %p251 = pneg %p138
        %p252 = pneg %p167
        %p253 = pneg %p164
        %s254 = sand.u32 %s154, 1
        %s255 = scalar_lea.sflag [#allocation6], %s254
        %s256 = sand.u32 %s154, 1
        %s257 = scalar_lea.vmem [#allocation7], %s256
        %s258 = smul.u32 2, %s27
        %p259 = scmp.eq.s32.totalorder %s27, 0
        // Predicated region
        $region45: #{tpu_custom_call.1} parent=39 // pred_check
          %p260 = pneg %p259
        $region46: #{tpu_custom_call.1} parent=39 // pred_check_branch
          %262 = sbr.rel (%p260) target = $region48
        $region47: #{tpu_custom_call.1} parent=39 // pred_region
          %vm263 = vcmask 253952
          %264 = vst.msk [vmem:[#allocation2] sm:$0x1] %vm263, 0.0
          %265 = vst.msk [vmem:[#allocation3] sm:$0x1] %vm263, -inf
        $region48: #{tpu_custom_call.1} parent=39 // pred_fallthru
          _
        %v266 = vld [vmem:[%s232] sm:$0xff]
        %v267 = vld [vmem:[%s232 + $0x8] sm:$0xff]
        %v268 = vld [vmem:[%s232 + $0x10] sm:$0xff]
        %v269 = vld [vmem:[%s232 + $0x18] sm:$0xff]
        %v270 = vld [vmem:[%s232 + $0x20] sm:$0xff]
        %v271 = vld [vmem:[%s232 + $0x28] sm:$0xff]
        %v272 = vld [vmem:[%s232 + $0x30] sm:$0xff]
        %v273 = vld [vmem:[%s232 + $0x38] sm:$0xff]
        %v274 = vld [vmem:[#allocation2] sm:$0x1]
        %v275 = vadd.f32 %v266, %v267
        %276 = vadd.xlane.f32.xlu0 %v275
        %v277 = vpop.xlane.xlu0 %276
        %v278 = vadd.f32 %v268, %v269
        %279 = vadd.xlane.f32.xlu0 %v278
        %v280 = vpop.xlane.xlu0 %279
        %v281 = vadd.f32 %v270, %v271
        %282 = vadd.xlane.f32.xlu0 %v281
        %v283 = vpop.xlane.xlu0 %282
        %v284 = vadd.f32 %v272, %v273
        %285 = vadd.xlane.f32.xlu0 %v284
        %v286 = vpop.xlane.xlu0 %285
        %v291 = vlaneseq
        %v292 = vshrl.u32 %v291, 7
        %v293 = vsub.s32 0, %v292
        %v294 = vrot.slane %v277, %v293
        %v295 = vlaneseq
        %v296 = vshrl.u32 %v295, 7
        %v297 = vsub.s32 1, %v296
        %v298 = vrot.slane %v277, %v297
        %v299 = vlaneseq
        %v300 = vshrl.u32 %v299, 7
        %v301 = vsub.s32 2, %v300
        %v302 = vrot.slane %v277, %v301
        %v303 = vlaneseq
        %v304 = vshrl.u32 %v303, 7
        %v305 = vsub.s32 3, %v304
        %v306 = vrot.slane %v277, %v305
        %v307 = vlaneseq
        %v308 = vshrl.u32 %v307, 7
        %v309 = vsub.s32 4, %v308
        %v310 = vrot.slane %v277, %v309
        %v311 = vlaneseq
        %v312 = vshrl.u32 %v311, 7
        %v313 = vsub.s32 5, %v312
        %v314 = vrot.slane %v277, %v313
        %v315 = vlaneseq
        %v316 = vshrl.u32 %v315, 7
        %v317 = vsub.s32 6, %v316
        %v318 = vrot.slane %v277, %v317
        %v319 = vlaneseq
        %v320 = vshrl.u32 %v319, 7
        %v321 = vsub.s32 7, %v320
        %v322 = vrot.slane %v277, %v321
        %v323 = vlaneseq
        %v324 = vshrl.u32 %v323, 7
        %v325 = vsub.s32 0, %v324
        %v326 = vrot.slane %v280, %v325
        %v327 = vlaneseq
        %v328 = vshrl.u32 %v327, 7
        %v329 = vsub.s32 1, %v328
        %v330 = vrot.slane %v280, %v329
        %v331 = vlaneseq
        %v332 = vshrl.u32 %v331, 7
        %v333 = vsub.s32 2, %v332
        %v334 = vrot.slane %v280, %v333
        %v335 = vlaneseq
        %v336 = vshrl.u32 %v335, 7
        %v337 = vsub.s32 3, %v336
        %v338 = vrot.slane %v280, %v337
        %v339 = vlaneseq
        %v340 = vshrl.u32 %v339, 7
        %v341 = vsub.s32 4, %v340
        %v342 = vrot.slane %v280, %v341
        %v343 = vlaneseq
        %v344 = vshrl.u32 %v343, 7
        %v345 = vsub.s32 5, %v344
        %v346 = vrot.slane %v280, %v345
        %v347 = vlaneseq
        %v348 = vshrl.u32 %v347, 7
        %v349 = vsub.s32 6, %v348
        %v350 = vrot.slane %v280, %v349
        %v351 = vlaneseq
        %v352 = vshrl.u32 %v351, 7
        %v353 = vsub.s32 7, %v352
        %v354 = vrot.slane %v280, %v353
        %v355 = vlaneseq
        %v356 = vshrl.u32 %v355, 7
        %v357 = vsub.s32 0, %v356
        %v358 = vrot.slane %v283, %v357
        %v359 = vlaneseq
        %v360 = vshrl.u32 %v359, 7
        %v361 = vsub.s32 1, %v360
        %v362 = vrot.slane %v283, %v361
        %v363 = vlaneseq
        %v364 = vshrl.u32 %v363, 7
        %v365 = vsub.s32 2, %v364
        %v366 = vrot.slane %v283, %v365
        %v367 = vlaneseq
        %v368 = vshrl.u32 %v367, 7
        %v369 = vsub.s32 3, %v368
        %v370 = vrot.slane %v283, %v369
        %v371 = vlaneseq
        %v372 = vshrl.u32 %v371, 7
        %v373 = vsub.s32 4, %v372
        %v374 = vrot.slane %v283, %v373
        %v375 = vlaneseq
        %v376 = vshrl.u32 %v375, 7
        %v377 = vsub.s32 5, %v376
        %v378 = vrot.slane %v283, %v377
        %v379 = vlaneseq
        %v380 = vshrl.u32 %v379, 7
        %v381 = vsub.s32 6, %v380
        %v382 = vrot.slane %v283, %v381
        %v383 = vlaneseq
        %v384 = vshrl.u32 %v383, 7
        %v385 = vsub.s32 7, %v384
        %v386 = vrot.slane %v283, %v385
        %v387 = vlaneseq
        %v388 = vshrl.u32 %v387, 7
        %v389 = vsub.s32 0, %v388
        %v390 = vrot.slane %v286, %v389
        %v391 = vlaneseq
        %v392 = vshrl.u32 %v391, 7
        %v393 = vsub.s32 1, %v392
        %v394 = vrot.slane %v286, %v393
        %v395 = vlaneseq
        %v396 = vshrl.u32 %v395, 7
        %v397 = vsub.s32 2, %v396
        %v398 = vrot.slane %v286, %v397
        %v399 = vlaneseq
        %v400 = vshrl.u32 %v399, 7
        %v401 = vsub.s32 3, %v400
        %v402 = vrot.slane %v286, %v401
        %v403 = vlaneseq
        %v404 = vshrl.u32 %v403, 7
        %v405 = vsub.s32 4, %v404
        %v406 = vrot.slane %v286, %v405
        %v407 = vlaneseq
        %v408 = vshrl.u32 %v407, 7
        %v409 = vsub.s32 5, %v408
        %v410 = vrot.slane %v286, %v409
        %v411 = vlaneseq
        %v412 = vshrl.u32 %v411, 7
        %v413 = vsub.s32 6, %v412
        %v414 = vrot.slane %v286, %v413
        %v415 = vlaneseq
        %v416 = vshrl.u32 %v415, 7
        %v417 = vsub.s32 7, %v416
        %v418 = vrot.slane %v286, %v417
        %v419 = vcombine.low %v294, %v298
        %v420 = vcombine.low %v302, %v306
        %v421 = vcombine.low %v310, %v314
        %v422 = vcombine.low %v318, %v322
        %v424 = vunpack.c.l.s4 1966171168
        %v425 = vunpack.c.0.s8 %v424
        %v426 = vlaneseq
        %v427 = vshrl.u32 %v426, 7
        %v428 = vsub.s32 %v425, %v427
        %v429 = vrot.slane %v419, %v428
        %v431 = vunpack.c.l.s4 1966171168
        %v432 = vunpack.c.0.s8 %v431
        %v433 = vlaneseq
        %v434 = vshrl.u32 %v433, 7
        %v435 = vsub.s32 %v432, %v434
        %v436 = vrot.slane %v420, %v435
        %v438 = vunpack.c.l.s4 1966171168
        %v439 = vunpack.c.0.s8 %v438
        %v440 = vlaneseq
        %v441 = vshrl.u32 %v440, 7
        %v442 = vsub.s32 %v439, %v441
        %v443 = vrot.slane %v421, %v442
        %v445 = vunpack.c.l.s4 1966171168
        %v446 = vunpack.c.0.s8 %v445
        %v447 = vlaneseq
        %v448 = vshrl.u32 %v447, 7
        %v449 = vsub.s32 %v446, %v448
        %v450 = vrot.slane %v422, %v449
        %v451 = vcombine.low %v429, %v436
        %v452 = vcombine.low %v443, %v450
        %v454 = vunpack.c.l.s4 1966171168
        %v455 = vunpack.c.0.s8 %v454
        %v456 = vlaneseq
        %v457 = vshrl.u32 %v456, 7
        %v458 = vsub.s32 %v455, %v457
        %v459 = vrot.slane %v451, %v458
        %v461 = vunpack.c.l.s4 1966171168
        %v462 = vunpack.c.0.s8 %v461
        %v463 = vlaneseq
        %v464 = vshrl.u32 %v463, 7
        %v465 = vsub.s32 %v462, %v464
        %v466 = vrot.slane %v452, %v465
        %v467 = vcombine.low %v459, %v466
        %v468 = vcombine.low %v326, %v330
        %v469 = vcombine.low %v334, %v338
        %v470 = vcombine.low %v342, %v346
        %v471 = vcombine.low %v350, %v354
        %v473 = vunpack.c.l.s4 1966171168
        %v474 = vunpack.c.0.s8 %v473
        %v475 = vlaneseq
        %v476 = vshrl.u32 %v475, 7
        %v477 = vsub.s32 %v474, %v476
        %v478 = vrot.slane %v468, %v477
        %v480 = vunpack.c.l.s4 1966171168
        %v481 = vunpack.c.0.s8 %v480
        %v482 = vlaneseq
        %v483 = vshrl.u32 %v482, 7
        %v484 = vsub.s32 %v481, %v483
        %v485 = vrot.slane %v469, %v484
        %v487 = vunpack.c.l.s4 1966171168
        %v488 = vunpack.c.0.s8 %v487
        %v489 = vlaneseq
        %v490 = vshrl.u32 %v489, 7
        %v491 = vsub.s32 %v488, %v490
        %v492 = vrot.slane %v470, %v491
        %v494 = vunpack.c.l.s4 1966171168
        %v495 = vunpack.c.0.s8 %v494
        %v496 = vlaneseq
        %v497 = vshrl.u32 %v496, 7
        %v498 = vsub.s32 %v495, %v497
        %v499 = vrot.slane %v471, %v498
        %v500 = vcombine.low %v478, %v485
        %v501 = vcombine.low %v492, %v499
        %v503 = vunpack.c.l.s4 1966171168
        %v504 = vunpack.c.0.s8 %v503
        %v505 = vlaneseq
        %v506 = vshrl.u32 %v505, 7
        %v507 = vsub.s32 %v504, %v506
        %v508 = vrot.slane %v500, %v507
        %v510 = vunpack.c.l.s4 1966171168
        %v511 = vunpack.c.0.s8 %v510
        %v512 = vlaneseq
        %v513 = vshrl.u32 %v512, 7
        %v514 = vsub.s32 %v511, %v513
        %v515 = vrot.slane %v501, %v514
        %v516 = vcombine.low %v508, %v515
        %v517 = vcombine.low %v358, %v362
        %v518 = vcombine.low %v366, %v370
        %v519 = vcombine.low %v374, %v378
        %v520 = vcombine.low %v382, %v386
        %v522 = vunpack.c.l.s4 1966171168
        %v523 = vunpack.c.0.s8 %v522
        %v524 = vlaneseq
        %v525 = vshrl.u32 %v524, 7
        %v526 = vsub.s32 %v523, %v525
        %v527 = vrot.slane %v517, %v526
        %v529 = vunpack.c.l.s4 1966171168
        %v530 = vunpack.c.0.s8 %v529
        %v531 = vlaneseq
        %v532 = vshrl.u32 %v531, 7
        %v533 = vsub.s32 %v530, %v532
        %v534 = vrot.slane %v518, %v533
        %v536 = vunpack.c.l.s4 1966171168
        %v537 = vunpack.c.0.s8 %v536
        %v538 = vlaneseq
        %v539 = vshrl.u32 %v538, 7
        %v540 = vsub.s32 %v537, %v539
        %v541 = vrot.slane %v519, %v540
        %v543 = vunpack.c.l.s4 1966171168
        %v544 = vunpack.c.0.s8 %v543
        %v545 = vlaneseq
        %v546 = vshrl.u32 %v545, 7
        %v547 = vsub.s32 %v544, %v546
        %v548 = vrot.slane %v520, %v547
        %v549 = vcombine.low %v527, %v534
        %v550 = vcombine.low %v541, %v548
        %v552 = vunpack.c.l.s4 1966171168
        %v553 = vunpack.c.0.s8 %v552
        %v554 = vlaneseq
        %v555 = vshrl.u32 %v554, 7
        %v556 = vsub.s32 %v553, %v555
        %v557 = vrot.slane %v549, %v556
        %v559 = vunpack.c.l.s4 1966171168
        %v560 = vunpack.c.0.s8 %v559
        %v561 = vlaneseq
        %v562 = vshrl.u32 %v561, 7
        %v563 = vsub.s32 %v560, %v562
        %v564 = vrot.slane %v550, %v563
        %v565 = vcombine.low %v557, %v564
        %v566 = vcombine.low %v390, %v394
        %v567 = vcombine.low %v398, %v402
        %v568 = vcombine.low %v406, %v410
        %v569 = vcombine.low %v414, %v418
        %v571 = vunpack.c.l.s4 1966171168
        %v572 = vunpack.c.0.s8 %v571
        %v573 = vlaneseq
        %v574 = vshrl.u32 %v573, 7
        %v575 = vsub.s32 %v572, %v574
        %v576 = vrot.slane %v566, %v575
        %v578 = vunpack.c.l.s4 1966171168
        %v579 = vunpack.c.0.s8 %v578
        %v580 = vlaneseq
        %v581 = vshrl.u32 %v580, 7
        %v582 = vsub.s32 %v579, %v581
        %v583 = vrot.slane %v567, %v582
        %v585 = vunpack.c.l.s4 1966171168
        %v586 = vunpack.c.0.s8 %v585
        %v587 = vlaneseq
        %v588 = vshrl.u32 %v587, 7
        %v589 = vsub.s32 %v586, %v588
        %v590 = vrot.slane %v568, %v589
        %v592 = vunpack.c.l.s4 1966171168
        %v593 = vunpack.c.0.s8 %v592
        %v594 = vlaneseq
        %v595 = vshrl.u32 %v594, 7
        %v596 = vsub.s32 %v593, %v595
        %v597 = vrot.slane %v569, %v596
        %v598 = vcombine.low %v576, %v583
        %v599 = vcombine.low %v590, %v597
        %v601 = vunpack.c.l.s4 1966171168
        %v602 = vunpack.c.0.s8 %v601
        %v603 = vlaneseq
        %v604 = vshrl.u32 %v603, 7
        %v605 = vsub.s32 %v602, %v604
        %v606 = vrot.slane %v598, %v605
        %v608 = vunpack.c.l.s4 1966171168
        %v609 = vunpack.c.0.s8 %v608
        %v610 = vlaneseq
        %v611 = vshrl.u32 %v610, 7
        %v612 = vsub.s32 %v609, %v611
        %v613 = vrot.slane %v599, %v612
        %v614 = vcombine.low %v606, %v613
        %615 = vset.pattern.permute.xlu0 0
        %616 = vperm.xlu0 %615, %v467
        %v617 = vpop.permute.xlu0 %616
        %618 = vset.pattern.permute.xlu0 0
        %619 = vperm.xlu0 %618, %v516
        %v620 = vpop.permute.xlu0 %619
        %621 = vset.pattern.permute.xlu0 0
        %622 = vperm.xlu0 %621, %v565
        %v623 = vpop.permute.xlu0 %622
        %624 = vset.pattern.permute.xlu0 0
        %625 = vperm.xlu0 %624, %v614
        %v626 = vpop.permute.xlu0 %625
        %v627 = vlaneseq
        %v628 = vand.u32 %v627, 127
        %v629 = vlaneseq
        %v630 = vshrl.u32 %v629, 7
        %v631 = vsub.s32 %v628, %v630
        %v632 = vrot.slane %v617, %v631
        %v633 = vadd.s32 %v628, 4294967288
        %v634 = vlaneseq
        %v635 = vshrl.u32 %v634, 7
        %v636 = vsub.s32 %v633, %v635
        %v637 = vrot.slane %v620, %v636
        %vm638 = vcmask 130112
        %v639 = vsel %vm638, %v637, %v632
        %v640 = vadd.s32 %v628, 4294967280
        %v641 = vlaneseq
        %v642 = vshrl.u32 %v641, 7
        %v643 = vsub.s32 %v640, %v642
        %v644 = vrot.slane %v623, %v643
        %vm645 = vcmask 195712
        %v646 = vsel %vm645, %v644, %v639
        %v647 = vadd.s32 %v628, 4294967272
        %v648 = vlaneseq
        %v649 = vshrl.u32 %v648, 7
        %v650 = vsub.s32 %v647, %v649
        %v651 = vrot.slane %v626, %v650
        %vm652 = vcmask 261312
        %v653 = vsel %vm652, %v651, %v646
        %v655 = vunpack.c.l.s4 1966171168
        %v656 = vunpack.c.0.s8 %v655
        %v657 = vlaneseq
        %v658 = vshrl.u32 %v657, 7
        %v659 = vsub.s32 %v656, %v658
        %v660 = vrot.slane %v653, %v659
        %v662 = vunpack.c.l.s4 1966171168
        %v663 = vunpack.c.0.s8 %v662
        %v664 = vlaneseq
        %v665 = vshrl.u32 %v664, 7
        %v666 = vsub.s32 %v663, %v665
        %v667 = vrot.slane %v660, %v666
        %v669 = vadd.f32 %v274, %v667
        %vm670 = vcmask 253952
        %671 = vst.msk [vmem:[#allocation2] sm:$0x1] %vm670, %v669
        %v672 = vld [vmem:[#allocation3] sm:$0x1]
        %v673 = vmax.f32 %v266, %v267
        %674 = vmax.xlane.f32.xlu0 %v673
        %v675 = vpop.xlane.xlu0 %674
        %v676 = vmax.f32 %v268, %v269
        %677 = vmax.xlane.f32.xlu0 %v676
        %v678 = vpop.xlane.xlu0 %677
        %v679 = vmax.f32 %v270, %v271
        %680 = vmax.xlane.f32.xlu0 %v679
        %v681 = vpop.xlane.xlu0 %680
        %v682 = vmax.f32 %v272, %v273
        %683 = vmax.xlane.f32.xlu0 %v682
        %v684 = vpop.xlane.xlu0 %683
        %v689 = vlaneseq
        %v690 = vshrl.u32 %v689, 7
        %v691 = vsub.s32 0, %v690
        %v692 = vrot.slane %v675, %v691
        %v693 = vlaneseq
        %v694 = vshrl.u32 %v693, 7
        %v695 = vsub.s32 1, %v694
        %v696 = vrot.slane %v675, %v695
        %v697 = vlaneseq
        %v698 = vshrl.u32 %v697, 7
        %v699 = vsub.s32 2, %v698
        %v700 = vrot.slane %v675, %v699
        %v701 = vlaneseq
        %v702 = vshrl.u32 %v701, 7
        %v703 = vsub.s32 3, %v702
        %v704 = vrot.slane %v675, %v703
        %v705 = vlaneseq
        %v706 = vshrl.u32 %v705, 7
        %v707 = vsub.s32 4, %v706
        %v708 = vrot.slane %v675, %v707
        %v709 = vlaneseq
        %v710 = vshrl.u32 %v709, 7
        %v711 = vsub.s32 5, %v710
        %v712 = vrot.slane %v675, %v711
        %v713 = vlaneseq
        %v714 = vshrl.u32 %v713, 7
        %v715 = vsub.s32 6, %v714
        %v716 = vrot.slane %v675, %v715
        %v717 = vlaneseq
        %v718 = vshrl.u32 %v717, 7
        %v719 = vsub.s32 7, %v718
        %v720 = vrot.slane %v675, %v719
        %v721 = vlaneseq
        %v722 = vshrl.u32 %v721, 7
        %v723 = vsub.s32 0, %v722
        %v724 = vrot.slane %v678, %v723
        %v725 = vlaneseq
        %v726 = vshrl.u32 %v725, 7
        %v727 = vsub.s32 1, %v726
        %v728 = vrot.slane %v678, %v727
        %v729 = vlaneseq
        %v730 = vshrl.u32 %v729, 7
        %v731 = vsub.s32 2, %v730
        %v732 = vrot.slane %v678, %v731
        %v733 = vlaneseq
        %v734 = vshrl.u32 %v733, 7
        %v735 = vsub.s32 3, %v734
        %v736 = vrot.slane %v678, %v735
        %v737 = vlaneseq
        %v738 = vshrl.u32 %v737, 7
        %v739 = vsub.s32 4, %v738
        %v740 = vrot.slane %v678, %v739
        %v741 = vlaneseq
        %v742 = vshrl.u32 %v741, 7
        %v743 = vsub.s32 5, %v742
        %v744 = vrot.slane %v678, %v743
        %v745 = vlaneseq
        %v746 = vshrl.u32 %v745, 7
        %v747 = vsub.s32 6, %v746
        %v748 = vrot.slane %v678, %v747
        %v749 = vlaneseq
        %v750 = vshrl.u32 %v749, 7
        %v751 = vsub.s32 7, %v750
        %v752 = vrot.slane %v678, %v751
        %v753 = vlaneseq
        %v754 = vshrl.u32 %v753, 7
        %v755 = vsub.s32 0, %v754
        %v756 = vrot.slane %v681, %v755
        %v757 = vlaneseq
        %v758 = vshrl.u32 %v757, 7
        %v759 = vsub.s32 1, %v758
        %v760 = vrot.slane %v681, %v759
        %v761 = vlaneseq
        %v762 = vshrl.u32 %v761, 7
        %v763 = vsub.s32 2, %v762
        %v764 = vrot.slane %v681, %v763
        %v765 = vlaneseq
        %v766 = vshrl.u32 %v765, 7
        %v767 = vsub.s32 3, %v766
        %v768 = vrot.slane %v681, %v767
        %v769 = vlaneseq
        %v770 = vshrl.u32 %v769, 7
        %v771 = vsub.s32 4, %v770
        %v772 = vrot.slane %v681, %v771
        %v773 = vlaneseq
        %v774 = vshrl.u32 %v773, 7
        %v775 = vsub.s32 5, %v774
        %v776 = vrot.slane %v681, %v775
        %v777 = vlaneseq
        %v778 = vshrl.u32 %v777, 7
        %v779 = vsub.s32 6, %v778
        %v780 = vrot.slane %v681, %v779
        %v781 = vlaneseq
        %v782 = vshrl.u32 %v781, 7
        %v783 = vsub.s32 7, %v782
        %v784 = vrot.slane %v681, %v783
        %v785 = vlaneseq
        %v786 = vshrl.u32 %v785, 7
        %v787 = vsub.s32 0, %v786
        %v788 = vrot.slane %v684, %v787
        %v789 = vlaneseq
        %v790 = vshrl.u32 %v789, 7
        %v791 = vsub.s32 1, %v790
        %v792 = vrot.slane %v684, %v791
        %v793 = vlaneseq
        %v794 = vshrl.u32 %v793, 7
        %v795 = vsub.s32 2, %v794
        %v796 = vrot.slane %v684, %v795
        %v797 = vlaneseq
        %v798 = vshrl.u32 %v797, 7
        %v799 = vsub.s32 3, %v798
        %v800 = vrot.slane %v684, %v799
        %v801 = vlaneseq
        %v802 = vshrl.u32 %v801, 7
        %v803 = vsub.s32 4, %v802
        %v804 = vrot.slane %v684, %v803
        %v805 = vlaneseq
        %v806 = vshrl.u32 %v805, 7
        %v807 = vsub.s32 5, %v806
        %v808 = vrot.slane %v684, %v807
        %v809 = vlaneseq
        %v810 = vshrl.u32 %v809, 7
        %v811 = vsub.s32 6, %v810
        %v812 = vrot.slane %v684, %v811
        %v813 = vlaneseq
        %v814 = vshrl.u32 %v813, 7
        %v815 = vsub.s32 7, %v814
        %v816 = vrot.slane %v684, %v815
        %v817 = vcombine.low %v692, %v696
        %v818 = vcombine.low %v700, %v704
        %v819 = vcombine.low %v708, %v712
        %v820 = vcombine.low %v716, %v720
        %v822 = vunpack.c.l.s4 1966171168
        %v823 = vunpack.c.0.s8 %v822
        %v824 = vlaneseq
        %v825 = vshrl.u32 %v824, 7
        %v826 = vsub.s32 %v823, %v825
        %v827 = vrot.slane %v817, %v826
        %v829 = vunpack.c.l.s4 1966171168
        %v830 = vunpack.c.0.s8 %v829
        %v831 = vlaneseq
        %v832 = vshrl.u32 %v831, 7
        %v833 = vsub.s32 %v830, %v832
        %v834 = vrot.slane %v818, %v833
        %v836 = vunpack.c.l.s4 1966171168
        %v837 = vunpack.c.0.s8 %v836
        %v838 = vlaneseq
        %v839 = vshrl.u32 %v838, 7
        %v840 = vsub.s32 %v837, %v839
        %v841 = vrot.slane %v819, %v840
        %v843 = vunpack.c.l.s4 1966171168
        %v844 = vunpack.c.0.s8 %v843
        %v845 = vlaneseq
        %v846 = vshrl.u32 %v845, 7
        %v847 = vsub.s32 %v844, %v846
        %v848 = vrot.slane %v820, %v847
        %v849 = vcombine.low %v827, %v834
        %v850 = vcombine.low %v841, %v848
        %v852 = vunpack.c.l.s4 1966171168
        %v853 = vunpack.c.0.s8 %v852
        %v854 = vlaneseq
        %v855 = vshrl.u32 %v854, 7
        %v856 = vsub.s32 %v853, %v855
        %v857 = vrot.slane %v849, %v856
        %v859 = vunpack.c.l.s4 1966171168
        %v860 = vunpack.c.0.s8 %v859
        %v861 = vlaneseq
        %v862 = vshrl.u32 %v861, 7
        %v863 = vsub.s32 %v860, %v862
        %v864 = vrot.slane %v850, %v863
        %v865 = vcombine.low %v857, %v864
        %v866 = vcombine.low %v724, %v728
        %v867 = vcombine.low %v732, %v736
        %v868 = vcombine.low %v740, %v744
        %v869 = vcombine.low %v748, %v752
        %v871 = vunpack.c.l.s4 1966171168
        %v872 = vunpack.c.0.s8 %v871
        %v873 = vlaneseq
        %v874 = vshrl.u32 %v873, 7
        %v875 = vsub.s32 %v872, %v874
        %v876 = vrot.slane %v866, %v875
        %v878 = vunpack.c.l.s4 1966171168
        %v879 = vunpack.c.0.s8 %v878
        %v880 = vlaneseq
        %v881 = vshrl.u32 %v880, 7
        %v882 = vsub.s32 %v879, %v881
        %v883 = vrot.slane %v867, %v882
        %v885 = vunpack.c.l.s4 1966171168
        %v886 = vunpack.c.0.s8 %v885
        %v887 = vlaneseq
        %v888 = vshrl.u32 %v887, 7
        %v889 = vsub.s32 %v886, %v888
        %v890 = vrot.slane %v868, %v889
        %v892 = vunpack.c.l.s4 1966171168
        %v893 = vunpack.c.0.s8 %v892
        %v894 = vlaneseq
        %v895 = vshrl.u32 %v894, 7
        %v896 = vsub.s32 %v893, %v895
        %v897 = vrot.slane %v869, %v896
        %v898 = vcombine.low %v876, %v883
        %v899 = vcombine.low %v890, %v897
        %v901 = vunpack.c.l.s4 1966171168
        %v902 = vunpack.c.0.s8 %v901
        %v903 = vlaneseq
        %v904 = vshrl.u32 %v903, 7
        %v905 = vsub.s32 %v902, %v904
        %v906 = vrot.slane %v898, %v905
        %v908 = vunpack.c.l.s4 1966171168
        %v909 = vunpack.c.0.s8 %v908
        %v910 = vlaneseq
        %v911 = vshrl.u32 %v910, 7
        %v912 = vsub.s32 %v909, %v911
        %v913 = vrot.slane %v899, %v912
        %v914 = vcombine.low %v906, %v913
        %v915 = vcombine.low %v756, %v760
        %v916 = vcombine.low %v764, %v768
        %v917 = vcombine.low %v772, %v776
        %v918 = vcombine.low %v780, %v784
        %v920 = vunpack.c.l.s4 1966171168
        %v921 = vunpack.c.0.s8 %v920
        %v922 = vlaneseq
        %v923 = vshrl.u32 %v922, 7
        %v924 = vsub.s32 %v921, %v923
        %v925 = vrot.slane %v915, %v924
        %v927 = vunpack.c.l.s4 1966171168
        %v928 = vunpack.c.0.s8 %v927
        %v929 = vlaneseq
        %v930 = vshrl.u32 %v929, 7
        %v931 = vsub.s32 %v928, %v930
        %v932 = vrot.slane %v916, %v931
        %v934 = vunpack.c.l.s4 1966171168
        %v935 = vunpack.c.0.s8 %v934
        %v936 = vlaneseq
        %v937 = vshrl.u32 %v936, 7
        %v938 = vsub.s32 %v935, %v937
        %v939 = vrot.slane %v917, %v938
        %v941 = vunpack.c.l.s4 1966171168
        %v942 = vunpack.c.0.s8 %v941
        %v943 = vlaneseq
        %v944 = vshrl.u32 %v943, 7
        %v945 = vsub.s32 %v942, %v944
        %v946 = vrot.slane %v918, %v945
        %v947 = vcombine.low %v925, %v932
        %v948 = vcombine.low %v939, %v946
        %v950 = vunpack.c.l.s4 1966171168
        %v951 = vunpack.c.0.s8 %v950
        %v952 = vlaneseq
        %v953 = vshrl.u32 %v952, 7
        %v954 = vsub.s32 %v951, %v953
        %v955 = vrot.slane %v947, %v954
        %v957 = vunpack.c.l.s4 1966171168
        %v958 = vunpack.c.0.s8 %v957
        %v959 = vlaneseq
        %v960 = vshrl.u32 %v959, 7
        %v961 = vsub.s32 %v958, %v960
        %v962 = vrot.slane %v948, %v961
        %v963 = vcombine.low %v955, %v962
        %v964 = vcombine.low %v788, %v792
        %v965 = vcombine.low %v796, %v800
        %v966 = vcombine.low %v804, %v808
        %v967 = vcombine.low %v812, %v816
        %v969 = vunpack.c.l.s4 1966171168
        %v970 = vunpack.c.0.s8 %v969
        %v971 = vlaneseq
        %v972 = vshrl.u32 %v971, 7
        %v973 = vsub.s32 %v970, %v972
        %v974 = vrot.slane %v964, %v973
        %v976 = vunpack.c.l.s4 1966171168
        %v977 = vunpack.c.0.s8 %v976
        %v978 = vlaneseq
        %v979 = vshrl.u32 %v978, 7
        %v980 = vsub.s32 %v977, %v979
        %v981 = vrot.slane %v965, %v980
        %v983 = vunpack.c.l.s4 1966171168
        %v984 = vunpack.c.0.s8 %v983
        %v985 = vlaneseq
        %v986 = vshrl.u32 %v985, 7
        %v987 = vsub.s32 %v984, %v986
        %v988 = vrot.slane %v966, %v987
        %v990 = vunpack.c.l.s4 1966171168
        %v991 = vunpack.c.0.s8 %v990
        %v992 = vlaneseq
        %v993 = vshrl.u32 %v992, 7
        %v994 = vsub.s32 %v991, %v993
        %v995 = vrot.slane %v967, %v994
        %v996 = vcombine.low %v974, %v981
        %v997 = vcombine.low %v988, %v995
        %v999 = vunpack.c.l.s4 1966171168
        %v1000 = vunpack.c.0.s8 %v999
        %v1001 = vlaneseq
        %v1002 = vshrl.u32 %v1001, 7
        %v1003 = vsub.s32 %v1000, %v1002
        %v1004 = vrot.slane %v996, %v1003
        %v1006 = vunpack.c.l.s4 1966171168
        %v1007 = vunpack.c.0.s8 %v1006
        %v1008 = vlaneseq
        %v1009 = vshrl.u32 %v1008, 7
        %v1010 = vsub.s32 %v1007, %v1009
        %v1011 = vrot.slane %v997, %v1010
        %v1012 = vcombine.low %v1004, %v1011
        %1013 = vset.pattern.permute.xlu0 0
        %1014 = vperm.xlu0 %1013, %v865
        %v1015 = vpop.permute.xlu0 %1014
        %1016 = vset.pattern.permute.xlu0 0
        %1017 = vperm.xlu0 %1016, %v914
        %v1018 = vpop.permute.xlu0 %1017
        %1019 = vset.pattern.permute.xlu0 0
        %1020 = vperm.xlu0 %1019, %v963
        %v1021 = vpop.permute.xlu0 %1020
        %1022 = vset.pattern.permute.xlu0 0
        %1023 = vperm.xlu0 %1022, %v1012
        %v1024 = vpop.permute.xlu0 %1023
        %v1025 = vlaneseq
        %v1026 = vshrl.u32 %v1025, 7
        %v1027 = vsub.s32 %v628, %v1026
        %v1028 = vrot.slane %v1015, %v1027
        %v1029 = vlaneseq
        %v1030 = vshrl.u32 %v1029, 7
        %v1031 = vsub.s32 %v633, %v1030
        %v1032 = vrot.slane %v1018, %v1031
        %v1033 = vsel %vm638, %v1032, %v1028
        %v1034 = vlaneseq
        %v1035 = vshrl.u32 %v1034, 7
        %v1036 = vsub.s32 %v640, %v1035
        %v1037 = vrot.slane %v1021, %v1036
        %v1038 = vsel %vm645, %v1037, %v1033
        %v1039 = vlaneseq
        %v1040 = vshrl.u32 %v1039, 7
        %v1041 = vsub.s32 %v647, %v1040
        %v1042 = vrot.slane %v1024, %v1041
        %v1043 = vsel %vm652, %v1042, %v1038
        %v1045 = vunpack.c.l.s4 1966171168
        %v1046 = vunpack.c.0.s8 %v1045
        %v1047 = vlaneseq
        %v1048 = vshrl.u32 %v1047, 7
        %v1049 = vsub.s32 %v1046, %v1048
        %v1050 = vrot.slane %v1043, %v1049
        %v1052 = vunpack.c.l.s4 1966171168
        %v1053 = vunpack.c.0.s8 %v1052
        %v1054 = vlaneseq
        %v1055 = vshrl.u32 %v1054, 7
        %v1056 = vsub.s32 %v1053, %v1055
        %v1057 = vrot.slane %v1050, %v1056
        %v1059 = vmax.f32 %v672, %v1057
        %1060 = vst.msk [vmem:[#allocation3] sm:$0x1] %vm670, %v1059
        // Predicated region
        $region49: #{tpu_custom_call.1} parent=39 // pred_check
          %p1061 = pneg %p259
        $region50: #{tpu_custom_call.1} parent=39 // pred_check_branch
          %1063 = sbr.rel (%p1061) target = $region52
        $region51: #{tpu_custom_call.1} parent=39 // pred_region
          %v1064 = vld [vmem:[#allocation2] sm:$0x1]
          %v1065 = vmul.f32 %v1064, 0.00390625
          %v1066 = vld [vmem:[#allocation3] sm:$0x1]
          %v1067 = vld [vmem:[%s1] sm:$0xff]
          %v1068 = vld [vmem:[%s1 + $0x8] sm:$0xff]
          %v1069 = vld [vmem:[%s1 + $0x10] sm:$0xff]
          %v1070 = vld [vmem:[%s1 + $0x18] sm:$0xff]
          %v1071 = vld [vmem:[%s2] sm:$0x1]
          %vm1072 = vcmask 261120
          %v1074 = vsel %vm1072, %v1065, 0
          %1076 = vmatprep.subr.mxu0 0.0
          %1077 = vmatpush1.msra.mxu0 %v1067
          %1078 = vmatprep.subr.mxu0 0.0
          %1079 = vmatpush1.msra.mxu0 %v1068
          %1080 = vmatprep.subr.mxu0 0.0
          %1081 = vmatpush1.msra.mxu0 %v1069
          %1082 = vmatprep.subr.mxu0 0.0
          %1083 = vmatpush1.msra.mxu0 %v1070
          %1084 = vmatprep.subr.mxu0 0.0
          %1085 = vmatpush1.msra.mxu0 0.0
          %1086 = vmatprep.subr.mxu0 0.0
          %1087 = vmatpush1.msra.mxu0 0.0
          %1088 = vmatprep.subr.mxu0 0.0
          %1089 = vmatpush1.msra.mxu0 0.0
          %1090 = vmatprep.subr.mxu0 0.0
          %1091 = vmatpush1.msra.mxu0 0.0
          %1092 = vmatprep.subr.mxu0 0.0
          %1093 = vmatpush1.msra.mxu0 0.0
          %1094 = vmatprep.subr.mxu0 0.0
          %1095 = vmatpush1.msra.mxu0 0.0
          %1096 = vmatprep.subr.mxu0 0.0
          %1097 = vmatpush1.msra.mxu0 0.0
          %1098 = vmatprep.subr.mxu0 0.0
          %1099 = vmatpush1.msra.mxu0 0.0
          %1100 = vmatprep.subr.mxu0 0.0
          %1101 = vmatpush1.msra.mxu0 0.0
          %1102 = vmatprep.subr.mxu0 0.0
          %1103 = vmatpush1.msra.mxu0 0.0
          %1104 = vmatprep.subr.mxu0 0.0
          %1105 = vmatpush1.msra.mxu0 0.0
          %1106 = vmatprep.subr.mxu0 0.0
          %1107 = vmatpush1.msra.mxu0 0.0
          %1108 = vmatprep.subr.mxu0 0.0
          %1109 = vmatpush1.msra.mxu0 0.0
          %1110 = vmatprep.subr.mxu0 0.0
          %1111 = vmatpush1.msra.mxu0 0.0
          %1112 = vmatprep.subr.mxu0 0.0
          %1113 = vmatpush1.msra.mxu0 0.0
          %1114 = vmatprep.subr.mxu0 0.0
          %1115 = vmatpush1.msra.mxu0 0.0
          %1116 = vmatprep.subr.mxu0 0.0
          %1117 = vmatpush1.msra.mxu0 0.0
          %1118 = vmatprep.subr.mxu0 0.0
          %1119 = vmatpush1.msra.mxu0 0.0
          %1120 = vmatprep.subr.mxu0 0.0
          %1121 = vmatpush1.msra.mxu0 0.0
          %1122 = vmatprep.subr.mxu0 0.0
          %1123 = vmatpush1.msra.mxu0 0.0
          %1124 = vmatprep.subr.mxu0 0.0
          %1125 = vmatpush1.msra.mxu0 0.0
          %1126 = vmatprep.subr.mxu0 0.0
          %1127 = vmatpush1.msra.mxu0 0.0
          %1128 = vmatprep.subr.mxu0 0.0
          %1129 = vmatpush1.msra.mxu0 0.0
          %1130 = vmatprep.subr.mxu0 0.0
          %1131 = vmatpush1.msra.mxu0 0.0
          %1132 = vmatprep.subr.mxu0 0.0
          %1133 = vmatpush1.msra.mxu0 0.0
          %1134 = vmatprep.subr.mxu0 0.0
          %1135 = vmatpush1.msra.mxu0 0.0
          %1136 = vmatprep.subr.mxu0 0.0
          %1137 = vmatpush1.msra.mxu0 0.0
          %1138 = vmatprep.subr.mxu0 0.0
          %1139 = vmatpush1.msra.mxu0 0.0
          %1140 = vmatprep.mubr.f32.mxu0 0.0
          %1141 = vmatmul.mubr.f32.gmra.mrb[0].mxu0 %v1074
          %v1142 = vpop.f32.mrb[0].mxu0
          %v1143 = vadd.f32 %v1071, %v1142
          %v1144 = vpop.f32.mrb[0].mxu0
          %1145 = vdwg.mxu0
          %v1146 = vmax.f32 %v1143, 0.0
          %v1148 = vsel %vm1072, %v1066, 0
          %1150 = vmatprep.subr.mxu0 0.0
          %1151 = vmatpush1.msra.mxu0 %v1067
          %1152 = vmatprep.subr.mxu0 0.0
          %1153 = vmatpush1.msra.mxu0 %v1068
          %1154 = vmatprep.subr.mxu0 0.0
          %1155 = vmatpush1.msra.mxu0 %v1069
          %1156 = vmatprep.subr.mxu0 0.0
          %1157 = vmatpush1.msra.mxu0 %v1070
          %1158 = vmatprep.subr.mxu0 0.0
          %1159 = vmatpush1.msra.mxu0 0.0
          %1160 = vmatprep.subr.mxu0 0.0
          %1161 = vmatpush1.msra.mxu0 0.0
          %1162 = vmatprep.subr.mxu0 0.0
          %1163 = vmatpush1.msra.mxu0 0.0
          %1164 = vmatprep.subr.mxu0 0.0
          %1165 = vmatpush1.msra.mxu0 0.0
          %1166 = vmatprep.subr.mxu0 0.0
          %1167 = vmatpush1.msra.mxu0 0.0
          %1168 = vmatprep.subr.mxu0 0.0
          %1169 = vmatpush1.msra.mxu0 0.0
          %1170 = vmatprep.subr.mxu0 0.0
          %1171 = vmatpush1.msra.mxu0 0.0
          %1172 = vmatprep.subr.mxu0 0.0
          %1173 = vmatpush1.msra.mxu0 0.0
          %1174 = vmatprep.subr.mxu0 0.0
          %1175 = vmatpush1.msra.mxu0 0.0
          %1176 = vmatprep.subr.mxu0 0.0
          %1177 = vmatpush1.msra.mxu0 0.0
          %1178 = vmatprep.subr.mxu0 0.0
          %1179 = vmatpush1.msra.mxu0 0.0
          %1180 = vmatprep.subr.mxu0 0.0
          %1181 = vmatpush1.msra.mxu0 0.0
          %1182 = vmatprep.subr.mxu0 0.0
          %1183 = vmatpush1.msra.mxu0 0.0
          %1184 = vmatprep.subr.mxu0 0.0
          %1185 = vmatpush1.msra.mxu0 0.0
          %1186 = vmatprep.subr.mxu0 0.0
          %1187 = vmatpush1.msra.mxu0 0.0
          %1188 = vmatprep.subr.mxu0 0.0
          %1189 = vmatpush1.msra.mxu0 0.0
          %1190 = vmatprep.subr.mxu0 0.0
          %1191 = vmatpush1.msra.mxu0 0.0
          %1192 = vmatprep.subr.mxu0 0.0
          %1193 = vmatpush1.msra.mxu0 0.0
          %1194 = vmatprep.subr.mxu0 0.0
          %1195 = vmatpush1.msra.mxu0 0.0
          %1196 = vmatprep.subr.mxu0 0.0
          %1197 = vmatpush1.msra.mxu0 0.0
          %1198 = vmatprep.subr.mxu0 0.0
          %1199 = vmatpush1.msra.mxu0 0.0
          %1200 = vmatprep.subr.mxu0 0.0
          %1201 = vmatpush1.msra.mxu0 0.0
          %1202 = vmatprep.subr.mxu0 0.0
          %1203 = vmatpush1.msra.mxu0 0.0
          %1204 = vmatprep.subr.mxu0 0.0
          %1205 = vmatpush1.msra.mxu0 0.0
          %1206 = vmatprep.subr.mxu0 0.0
          %1207 = vmatpush1.msra.mxu0 0.0
          %1208 = vmatprep.subr.mxu0 0.0
          %1209 = vmatpush1.msra.mxu0 0.0
          %1210 = vmatprep.subr.mxu0 0.0
          %1211 = vmatpush1.msra.mxu0 0.0
          %1212 = vmatprep.subr.mxu0 0.0
          %1213 = vmatpush1.msra.mxu0 0.0
          %1214 = vmatprep.mubr.f32.mxu0 0.0
          %1215 = vmatmul.mubr.f32.gmra.mrb[0].mxu0 %v1148
          %v1216 = vpop.f32.mrb[0].mxu0
          %v1217 = vadd.f32 %v1071, %v1216
          %v1218 = vpop.f32.mrb[0].mxu0
          %1219 = vdwg.mxu0
          %v1220 = vmax.f32 %v1217, 0.0
          %v1221 = vadd.f32 %v1146, %v1220
          %v1222 = vld [vmem:[%s3] sm:$0x3]
          %v1223 = vld [vmem:[%s4] sm:$0x1]
          %v1224 = vmul.f32 %v1223, 2.0
          %vm1225 = vcmask 15360
          %v1227 = vsel %vm1225, %v1221, 0
          %vm1229 = vcmask 1041408
          %v1231 = vsel %vm1229, %v1222, 0
          %1233 = vmatprep.subr.mxu0 0.0
          %1234 = vmatpush1.msra.mxu0 %v1231
          %1235 = vmatprep.subr.mxu0 0.0
          %1236 = vmatpush1.msra.mxu0 0.0
          %1237 = vmatprep.subr.mxu0 0.0
          %1238 = vmatpush1.msra.mxu0 0.0
          %1239 = vmatprep.subr.mxu0 0.0
          %1240 = vmatpush1.msra.mxu0 0.0
          %1241 = vmatprep.subr.mxu0 0.0
          %1242 = vmatpush1.msra.mxu0 0.0
          %1243 = vmatprep.subr.mxu0 0.0
          %1244 = vmatpush1.msra.mxu0 0.0
          %1245 = vmatprep.subr.mxu0 0.0
          %1246 = vmatpush1.msra.mxu0 0.0
          %1247 = vmatprep.subr.mxu0 0.0
          %1248 = vmatpush1.msra.mxu0 0.0
          %1249 = vmatprep.subr.mxu0 0.0
          %1250 = vmatpush1.msra.mxu0 0.0
          %1251 = vmatprep.subr.mxu0 0.0
          %1252 = vmatpush1.msra.mxu0 0.0
          %1253 = vmatprep.subr.mxu0 0.0
          %1254 = vmatpush1.msra.mxu0 0.0
          %1255 = vmatprep.subr.mxu0 0.0
          %1256 = vmatpush1.msra.mxu0 0.0
          %1257 = vmatprep.subr.mxu0 0.0
          %1258 = vmatpush1.msra.mxu0 0.0
          %1259 = vmatprep.subr.mxu0 0.0
          %1260 = vmatpush1.msra.mxu0 0.0
          %1261 = vmatprep.subr.mxu0 0.0
          %1262 = vmatpush1.msra.mxu0 0.0
          %1263 = vmatprep.subr.mxu0 0.0
          %1264 = vmatpush1.msra.mxu0 0.0
          %1265 = vmatprep.subr.mxu0 0.0
          %1266 = vmatpush1.msra.mxu0 0.0
          %1267 = vmatprep.subr.mxu0 0.0
          %1268 = vmatpush1.msra.mxu0 0.0
          %1269 = vmatprep.subr.mxu0 0.0
          %1270 = vmatpush1.msra.mxu0 0.0
          %1271 = vmatprep.subr.mxu0 0.0
          %1272 = vmatpush1.msra.mxu0 0.0
          %1273 = vmatprep.subr.mxu0 0.0
          %1274 = vmatpush1.msra.mxu0 0.0
          %1275 = vmatprep.subr.mxu0 0.0
          %1276 = vmatpush1.msra.mxu0 0.0
          %1277 = vmatprep.subr.mxu0 0.0
          %1278 = vmatpush1.msra.mxu0 0.0
          %1279 = vmatprep.subr.mxu0 0.0
          %1280 = vmatpush1.msra.mxu0 0.0
          %1281 = vmatprep.subr.mxu0 0.0
          %1282 = vmatpush1.msra.mxu0 0.0
          %1283 = vmatprep.subr.mxu0 0.0
          %1284 = vmatpush1.msra.mxu0 0.0
          %1285 = vmatprep.subr.mxu0 0.0
          %1286 = vmatpush1.msra.mxu0 0.0
          %1287 = vmatprep.subr.mxu0 0.0
          %1288 = vmatpush1.msra.mxu0 0.0
          %1289 = vmatprep.subr.mxu0 0.0
          %1290 = vmatpush1.msra.mxu0 0.0
          %1291 = vmatprep.subr.mxu0 0.0
          %1292 = vmatpush1.msra.mxu0 0.0
          %1293 = vmatprep.subr.mxu0 0.0
          %1294 = vmatpush1.msra.mxu0 0.0
          %1295 = vmatprep.subr.mxu0 0.0
          %1296 = vmatpush1.msra.mxu0 0.0
          %1297 = vmatprep.mubr.f32.mxu0 0.0
          %1298 = vmatmul.mubr.f32.gmra.mrb[0].mxu0 %v1227
          %v1299 = vpop.f32.mrb[0].mxu0
          %v1300 = vadd.f32 %v1224, %v1299
          %v1301 = vpop.f32.mrb[0].mxu0
          %1302 = vdwg.mxu0
          %1303 = vst.msk [vmem:[%s257] sm:$0x1] %vm670, %v1300
        $region52: #{tpu_custom_call.1} parent=39 // pred_fallthru
          _
        %s1304 = sand.u32 %s154, 1
        %s1305 = scalar_lea.sflag [#allocation6], %s1304
        %s1306 = sand.u32 %s154, 1
        %s1307 = scalar_lea.vmem [#allocation7], %s1306
        // Predicated region
        $region53: #{tpu_custom_call.1} parent=39 // pred_check
          %p1308 = pneg %p164
        $region54: #{tpu_custom_call.1} parent=39 // pred_check_branch
          %1310 = sbr.rel (%p1308) target = $region56
        $region55: #{tpu_custom_call.1} parent=39 // pred_region
          %s1312 = ssub.s32 16, 16
          %1313 = vsyncadd %s1305, %s1312
          %s1314 = smul.addr %s26, 16
          %s1315 = scalar_lea.hbm %s5, %s1314
          %s1317 = sshll.u32 %s1307, 4
          %s1318 = int_to_ptr.vmem [resolvable:$true] %s1317
          %1320 = dma.vmem_to_hbm [thread:$0]  %s1318, 16, %s1315, %s1305
        $region56: #{tpu_custom_call.1} parent=39 // pred_fallthru
          _
      $region40: #{tpu_custom_call.1} parent=5 // pred_fallthru
        _
      %p1321 = scmp.le.s32.totalorder 2, %s17
      // Predicated region
      $region57: #{tpu_custom_call.1} parent=5 // pred_check
        %p1322 = pneg %p1321
      $region58: #{tpu_custom_call.1} parent=5 // pred_check_branch
        %1324 = sbr.rel (%p1322) target = $region60
      $region59: #{tpu_custom_call.1} parent=5 // pred_region
        %s1325 = ssub.s32 %s17, 2
        // Predicated region
        $region61: #{tpu_custom_call.1} parent=59 // pred_check
          %p1326 = pneg %p170
        $region62: #{tpu_custom_call.1} parent=59 // pred_check_branch
          %1328 = sbr.rel (%p1326) target = $region64
        $region63: #{tpu_custom_call.1} parent=59 // pred_region
          %s1329 = sand.u32 %s155, 1
          %s1330 = scalar_lea.sflag [#allocation6], %s1329
          %s1331 = sand.u32 %s155, 1
          %s1332 = scalar_lea.vmem [#allocation7], %s1331
          %1333 = dma.done %s1330, 16
        $region64: #{tpu_custom_call.1} parent=59 // pred_fallthru
          _
      $region60: #{tpu_custom_call.1} parent=5 // pred_fallthru
        _
    $region6: #{tpu_custom_call.1} parent=1 // loop_footer
      %s21 = sadd.s32 1, %s17
    $region7: #{tpu_custom_call.1} parent=1 // loop_footer_branch
      %16 = sbr.rel target = $region3
    $region8: #{tpu_custom_call.1} parent=1 // loop_exit
      _
    %1334 = vsyncpa [#allocation5], 1
    %s1335 = scalar_lea.sflag [#allocation5], 1
    %1336 = vsyncpa %s1335, 1
    %1337 = vsyncpa [#allocation6], 1
    %s1338 = scalar_lea.sflag [#allocation6], 1
    %1339 = vsyncpa %s1338, 1

</llo_original>
